<compile_context>
chip_gen: v7x
topology: tpu7x:2x2x1
jax: 0.10.0
libtpu: 0.0.40
codegen_flags: <defaults>
</compile_context>

<pallas_src>
import functools
import math

import numpy as np
import jax
import jax.numpy as jnp
from jax.experimental import pallas as pl
from jax.experimental.pallas import tpu as pltpu


# ---------------------------------------------------------------------------
# Parameter / buffer setup (matches PositionalEncoding.__init__)
# ---------------------------------------------------------------------------
def make_positional_encoding_table(d_model, max_len=5000):
    position = jnp.arange(max_len, dtype=jnp.float32)[:, None]                  # (max_len, 1)
    div_term = jnp.exp(
        jnp.arange(0, d_model, 2, dtype=jnp.float32) * (-(math.log(10000.0) / d_model))
    )
    n_cos = d_model // 2                                                        # == pe[:,1::2].shape[1]
    pe = jnp.zeros((max_len, d_model), dtype=jnp.float32)
    pe = pe.at[:, 0::2].set(jnp.sin(position * div_term))
    pe = pe.at[:, 1::2].set(jnp.cos(position * div_term[:n_cos]))
    return pe[:, None, :]                                                       # (max_len, 1, d_model)


# ---------------------------------------------------------------------------
# Fast-path kernels: x viewed as (S, B*D); blocks (TILE_S, B*D) / pe (TILE_S, D).
# The seq axis sits in the sublane slot; lanes are dense since D % 128 == 0, so each
# per-batch chunk below is a 128-aligned, full-width vreg load/add/store.
# ---------------------------------------------------------------------------
def _pe_add_flat_kernel(x_ref, pe_ref, o_ref, *, batch, d_model):
    pe = pe_ref[...].astype(jnp.float32)                       # (TS, D), reused for every chunk
    for b in range(batch):                                     # static unroll (batch is small)
        sl = pl.ds(b * d_model, d_model)
        y = x_ref[:, sl].astype(jnp.float32) + pe
        o_ref[:, sl] = y.astype(o_ref.dtype)


def _pe_add_dropout_prng_flat_kernel(seed_ref, x_ref, pe_ref, o_ref, *,
                                     batch, d_model, threshold, scale):
    # Distinct mask per grid step; PRNG state advances across the per-batch chunks.
    pltpu.prng_seed(seed_ref[0] + pl.program_id(0))
    pe = pe_ref[...].astype(jnp.float32)
    for b in range(batch):
        sl = pl.ds(b * d_model, d_model)
        y = x_ref[:, sl].astype(jnp.float32) + pe
        bits = pltpu.bitcast(pltpu.prng_random_bits(y.shape), jnp.uint32)
        keep = bits >= jnp.uint32(threshold)                   # keep iff bits >= p*2^32
        o_ref[:, sl] = jnp.where(keep, y * scale, 0.0).astype(o_ref.dtype)


def _pe_add_dropout_bits_flat_kernel(x_ref, pe_ref, bits_ref, o_ref, *,
                                     batch, d_model, threshold, scale):
    pe = pe_ref[...].astype(jnp.float32)
    for b in range(batch):
        sl = pl.ds(b * d_model, d_model)
        y = x_ref[:, sl].astype(jnp.float32) + pe
        keep = bits_ref[:, sl] >= jnp.uint32(threshold)
        o_ref[:, sl] = jnp.where(keep, y * scale, 0.0).astype(o_ref.dtype)


# ---------------------------------------------------------------------------
# Fallback kernels (d_model not a multiple of 128): original 3-D (TILE_S, B, D) blocks.
# ---------------------------------------------------------------------------
def _pe_add_3d_kernel(x_ref, pe_ref, o_ref):
    y = x_ref[...].astype(jnp.float32) + pe_ref[...].astype(jnp.float32)   # (TS,B,D)+(TS,1,D)
    o_ref[...] = y.astype(o_ref.dtype)


def _pe_add_dropout_prng_3d_kernel(seed_ref, x_ref, pe_ref, o_ref, *, threshold, scale):
    pltpu.prng_seed(seed_ref[0] + pl.program_id(0))
    y = x_ref[...].astype(jnp.float32) + pe_ref[...].astype(jnp.float32)
    bits = pltpu.bitcast(pltpu.prng_random_bits(y.shape), jnp.uint32)
    keep = bits >= jnp.uint32(threshold)
    o_ref[...] = jnp.where(keep, y * scale, 0.0).astype(o_ref.dtype)


def _pe_add_dropout_bits_3d_kernel(x_ref, pe_ref, bits_ref, o_ref, *, threshold, scale):
    y = x_ref[...].astype(jnp.float32) + pe_ref[...].astype(jnp.float32)
    keep = bits_ref[...] >= jnp.uint32(threshold)
    o_ref[...] = jnp.where(keep, y * scale, 0.0).astype(o_ref.dtype)


# ---------------------------------------------------------------------------
# Wrapper
# ---------------------------------------------------------------------------
def _on_tpu():
    try:
        return jax.default_backend() == "tpu"
    except Exception:
        return False


def _choose_tile_s(S, x_row_bytes, live_row_bytes,
                   target_bytes=4 << 20, vmem_budget_bytes=24 << 20):
    """Seq rows per tile.

    Aims for ~4 MiB x blocks (amortizes the ~0.35 us grid-step overhead — matters most on
    v7x's ~3.2 TB/s HBM) while keeping the double-buffered live-VMEM footprint
    (`live_row_bytes` already includes the 2x buffering) under ~24 MiB so it fits v7x's
    32 MiB scoped / 64 MiB physical VMEM with headroom (v5e/v6e have more).
    Returned value is either a multiple of 8 (sublane-aligned: seq is the sublane dim in
    the flat layout) or exactly S.
    """
    rows = min(target_bytes // max(1, x_row_bytes),
               vmem_budget_bytes // max(1, live_row_bytes))
    rows = max(1, rows)
    if rows >= S:
        # Whole sequence fits in one tile; if it is big enough, still use two tiles so
        # v7x's two TensorCores both get work under dimension_semantics=("parallel",).
        if S >= 16 and S * x_row_bytes >= (2 << 20):
            rows = -(-S // 2)
        else:
            return int(S)
    rows = max(8, (rows // 8) * 8)
    return int(min(rows, S))


def positional_encoding(x, pe_table, *, p=0.1, train=False, seed=0, rng_key=None):
    S, B, D = x.shape
    max_len = pe_table.shape[0]
    out_dtype = jnp.result_type(x.dtype, pe_table.dtype)      # torch-style promotion (bf16 -> f32)

    training = bool(train) and p > 0.0
    threshold = min(int(round(p * (1 << 32))), (1 << 32) - 1)  # keep iff bits >= p*2^32
    scale = 1.0 / (1.0 - p) if p < 1.0 else 0.0

    on_tpu = _on_tpu()
    use_flat = (D % 128 == 0)                                  # lane-dense fast path
    stream_bits = training and not on_tpu                      # non-TPU fallback for dropout

    # Tile size (seq rows) from HBM-streaming / VMEM-budget considerations.
    itx = jnp.dtype(x.dtype).itemsize
    ito = jnp.dtype(out_dtype).itemsize
    itp = jnp.dtype(pe_table.dtype).itemsize
    x_row = B * D * itx
    live_row = 2 * (x_row + B * D * ito + D * itp + (B * D * 4 if stream_bits else 0))
    tile_s = _choose_tile_s(S, x_row, live_row)
    grid = (pl.cdiv(S, tile_s),)

    cparams = None
    if on_tpu:
        cparams = pltpu.CompilerParams(
            dimension_semantics=("parallel",),                 # v7x two-TC sharding of the seq loop
            vmem_limit_bytes=32 << 20,                         # explicit scoped-VMEM budget
        )

    if rng_key is None:
        rng_key = jax.random.PRNGKey(seed)
    seed_arr = jnp.array([seed], dtype=jnp.int32)

    # ---------------- fast path: (S, B*D) view, seq in sublanes, dense lanes ----------------
    if use_flat:
        BD = B * D
        x_in = x.reshape(S, BD)                                # free (no data movement)
        pe_full = pe_table.reshape(max_len, D)                 # full fp32 table, no slice/cast pass
        pe_in = pe_full if (tile_s % 8 == 0 or tile_s == max_len) else pe_full[:S]

        x_spec = pl.BlockSpec((tile_s, BD), lambda s: (s, 0))
        pe_spec = pl.BlockSpec((tile_s, D), lambda s: (s, 0))
        o_spec = pl.BlockSpec((tile_s, BD), lambda s: (s, 0))
        out_shape = jax.ShapeDtypeStruct((S, BD), out_dtype)

        if not training:
            kernel = functools.partial(_pe_add_flat_kernel, batch=B, d_model=D)
            out = pl.pallas_call(
                kernel, out_shape=out_shape, grid=grid,
                in_specs=[x_spec, pe_spec], out_specs=o_spec,
                compiler_params=cparams,
            )(x_in, pe_in)
        elif on_tpu:
            kernel = functools.partial(_pe_add_dropout_prng_flat_kernel,
                                       batch=B, d_model=D, threshold=threshold, scale=scale)
            out = pl.pallas_call(
                kernel, out_shape=out_shape,
                grid_spec=pltpu.PrefetchScalarGridSpec(
                    num_scalar_prefetch=1, grid=grid,
                    in_specs=[pl.BlockSpec((tile_s, BD), lambda s, sd: (s, 0)),
                              pl.BlockSpec((tile_s, D), lambda s, sd: (s, 0))],
                    out_specs=pl.BlockSpec((tile_s, BD), lambda s, sd: (s, 0))),
                compiler_params=cparams,
            )(seed_arr, x_in, pe_in)
        else:
            bits = jax.random.bits(rng_key, (S, BD), dtype=jnp.uint32)
            kernel = functools.partial(_pe_add_dropout_bits_flat_kernel,
                                       batch=B, d_model=D, threshold=threshold, scale=scale)
            bits_spec = pl.BlockSpec((tile_s, BD), lambda s: (s, 0))
            out = pl.pallas_call(
                kernel, out_shape=out_shape, grid=grid,
                in_specs=[x_spec, pe_spec, bits_spec], out_specs=o_spec,
                compiler_params=cparams,
            )(x_in, pe_in, bits)
        return out.reshape(S, B, D)

    # ---------------- fallback path: original 3-D blocks (any d_model) ----------------
    x_spec = pl.BlockSpec((tile_s, B, D), lambda s: (s, 0, 0))
    pe_spec = pl.BlockSpec((tile_s, 1, D), lambda s: (s, 0, 0))
    o_spec = pl.BlockSpec((tile_s, B, D), lambda s: (s, 0, 0))
    out_shape = jax.ShapeDtypeStruct((S, B, D), out_dtype)

    if not training:
        return pl.pallas_call(
            _pe_add_3d_kernel, out_shape=out_shape, grid=grid,
            in_specs=[x_spec, pe_spec], out_specs=o_spec,
            compiler_params=cparams,
        )(x, pe_table)
    if on_tpu:
        kernel = functools.partial(_pe_add_dropout_prng_3d_kernel,
                                   threshold=threshold, scale=scale)
        return pl.pallas_call(
            kernel, out_shape=out_shape,
            grid_spec=pltpu.PrefetchScalarGridSpec(
                num_scalar_prefetch=1, grid=grid,
                in_specs=[pl.BlockSpec((tile_s, B, D), lambda s, sd: (s, 0, 0)),
                          pl.BlockSpec((tile_s, 1, D), lambda s, sd: (s, 0, 0))],
                out_specs=pl.BlockSpec((tile_s, B, D), lambda s, sd: (s, 0, 0))),
            compiler_params=cparams,
        )(seed_arr, x, pe_table)
    bits = jax.random.bits(rng_key, (S, B, D), dtype=jnp.uint32)
    kernel = functools.partial(_pe_add_dropout_bits_3d_kernel,
                               threshold=threshold, scale=scale)
    bits_spec = pl.BlockSpec((tile_s, B, D), lambda s: (s, 0, 0))
    return pl.pallas_call(
        kernel, out_shape=out_shape, grid=grid,
        in_specs=[x_spec, pe_spec, bits_spec], out_specs=o_spec,
        compiler_params=cparams,
    )(x, pe_table, bits)


# ---------------------------------------------------------------------------
# Main
# ---------------------------------------------------------------------------
if __name__ == "__main__":
    p = 0.1
    max_len = 64
    key = jax.random.PRNGKey(0)
    k1, k2 = jax.random.split(key)

    # ---- fast (lane-dense) path: d_model multiple of 128 ----
    S, B, D = 8, 2, 128
    x = jax.random.normal(k1, (S, B, D), dtype=jnp.float32)
    pe_table = make_positional_encoding_table(D, max_len=max_len)
    ref = x + pe_table[:S]

    out_eval = jax.block_until_ready(positional_encoding(x, pe_table, p=p, train=False))
    np.testing.assert_allclose(np.asarray(out_eval), np.asarray(ref), rtol=1e-6, atol=1e-6)

    out_train = jax.block_until_ready(
        positional_encoding(x, pe_table, p=p, train=True, seed=1234))
    out_np, ref_np = np.asarray(out_train), np.asarray(ref)
    kept = out_np != 0.0
    np.testing.assert_allclose(out_np[kept], ref_np[kept] / (1.0 - p), rtol=1e-5, atol=1e-5)
    drop_frac = 1.0 - kept.mean()
    assert 0.0 < drop_frac < 0.5 and out_np.shape == (S, B, D)

    # ---- fallback (3-D block) path: d_model not a multiple of 128 ----
    S2, B2, D2 = 8, 2, 32
    x2 = jax.random.normal(k2, (S2, B2, D2), dtype=jnp.float32)
    pe_table2 = make_positional_encoding_table(D2, max_len=max_len)
    ref2 = x2 + pe_table2[:S2]

    out2 = jax.block_until_ready(positional_encoding(x2, pe_table2, p=p, train=False))
    np.testing.assert_allclose(np.asarray(out2), np.asarray(ref2), rtol=1e-6, atol=1e-6)

    out2_t = jax.block_until_ready(
        positional_encoding(x2, pe_table2, p=p, train=True, seed=7))
    o2, r2 = np.asarray(out2_t), np.asarray(ref2)
    kept2 = o2 != 0.0
    np.testing.assert_allclose(o2[kept2], r2[kept2] / (1.0 - p), rtol=1e-5, atol=1e-5)

    print("KERNEL_OK")
</pallas_src>

<mosaic_0001>
module attributes {stable_mosaic.version = 11 : i64} {
  func.func @_pe_add_flat_kernel(%arg0: i32, %arg1: memref<8x256xf32, #tpu.memory_space<vmem>>, %arg2: memref<8x128xf32, #tpu.memory_space<vmem>>, %arg3: memref<8x256xf32, #tpu.memory_space<vmem>>) attributes {dimension_semantics = [#tpu.dimension_semantics<arbitrary>], iteration_bounds = array<i64: 1>, scalar_prefetch = 0 : i64, scratch_operands = 0 : i64, tpu.core_type = #tpu.core_type<tc>, window_params = [{transform_indices = @transform_0, window_bounds = array<i64: 8, 256>}, {transform_indices = @transform_1, window_bounds = array<i64: 8, 128>}, {transform_indices = @transform_2, window_bounds = array<i64: 8, 256>}]} {
    %c0 = arith.constant 0 : index
    %c0_0 = arith.constant 0 : index
    %0 = vector.load %arg2[%c0, %c0_0] : memref<8x128xf32, #tpu.memory_space<vmem>>, vector<8x128xf32>
    %c0_1 = arith.constant 0 : index
    %c0_2 = arith.constant 0 : index
    %1 = vector.load %arg1[%c0_1, %c0_2] : memref<8x256xf32, #tpu.memory_space<vmem>>, vector<8x128xf32>
    %2 = arith.addf %1, %0 : vector<8x128xf32>
    %c0_3 = arith.constant 0 : index
    %c0_4 = arith.constant 0 : index
    %3 = vector.load %arg3[%c0_3, %c0_4] : memref<8x256xf32, #tpu.memory_space<vmem>>, vector<8x128xf32>
    tpu.vector_store %arg3[%c0_3, %c0_4], %2 {strides = array<i32>} : memref<8x256xf32, #tpu.memory_space<vmem>>, vector<8x128xf32>,
    %c0_5 = arith.constant 0 : index
    %c128 = arith.constant 128 : index
    %4 = vector.load %arg1[%c0_5, %c128] : memref<8x256xf32, #tpu.memory_space<vmem>>, vector<8x128xf32>
    %5 = arith.addf %4, %0 : vector<8x128xf32>
    %c0_6 = arith.constant 0 : index
    %c128_7 = arith.constant 128 : index
    %6 = vector.load %arg3[%c0_6, %c128_7] : memref<8x256xf32, #tpu.memory_space<vmem>>, vector<8x128xf32>
    tpu.vector_store %arg3[%c0_6, %c128_7], %5 {strides = array<i32>} : memref<8x256xf32, #tpu.memory_space<vmem>>, vector<8x128xf32>,
    return
  }
  func.func @transform_0(%arg0: i32) -> (i32, i32) {
    %c0_i32 = arith.constant 0 : i32
    %c0_i32_0 = arith.constant 0 : i32
    return %arg0, %c0_i32 : i32, i32
  }
  func.func @transform_1(%arg0: i32) -> (i32, i32) {
    %c0_i32 = arith.constant 0 : i32
    %c0_i32_0 = arith.constant 0 : i32
    return %arg0, %c0_i32 : i32, i32
  }
  func.func @transform_2(%arg0: i32) -> (i32, i32) {
    %c0_i32 = arith.constant 0 : i32
    %c0_i32_0 = arith.constant 0 : i32
    return %arg0, %c0_i32 : i32, i32
  }
}

</mosaic_0001>

<llo_original>
// kernel: tpu_custom_call.1
$region0: #{tpu_custom_call.1}
  #allocation0 [shape = 'u32[]', space=smem, size = 0x4, offset = 0x4, fixed_abs, tag = 'smem constant byte address 0x4 - core index']
  #allocation1 [shape = 'u32[144,128]{1,0:T(1,128)}', space=vmem, size = 0x12000, scoped, tag = 'internal scratch']
  %s0 = inlined_call_operand.hbm [shape: f32[8,256], index: 0, kind: input, shape index: {}]
  %s1 = inlined_call_operand.hbm [shape: f32[64,128], index: 1, kind: input, shape index: {}]
  %s2 = inlined_call_operand.hbm [shape: f32[8,256], index: 2, kind: output, shape index: {}]
  %s3 = sld [smem:[#allocation0]]
  $region26: #{tpu_custom_call.1} parent=0
    _
  %s5 = ssub.s32 1, %s3
  %s6 = scalar_select 0, %s5, %s3
  $region1: #{tpu_custom_call.1} parent=0
    #allocation2 [shape = 'u8[8192]{0}', space=vmem, size = 0x2000, scoped, tag = 'input window, operand 0, single buffered']
    #allocation3 [shape = 's32[1]{0}', space=sflag, size = 0x4, scoped, tag = 'scoped memory for tpu_custom_call.1']
    #allocation4 [shape = 's32[1]{0}', space=sflag, size = 0x4, scoped, tag = 'scoped memory for tpu_custom_call.1']
    #allocation5 [shape = 'u8[4096]{0}', space=vmem, size = 0x1000, scoped, tag = 'input window, operand 1, single buffered']
    #allocation6 [shape = 's32[1]{0}', space=sflag, size = 0x4, scoped, tag = 'scoped memory for tpu_custom_call.1']
    #allocation7 [shape = 'u8[8192]{0}', space=vmem, size = 0x2000, scoped, tag = 'output window, operand 0, single buffered']
    %7 = vsyncpa [#allocation3], 0
    %8 = vsyncpa [#allocation6], 0
    %9 = vsyncpa [#allocation4], 0
    // Predicated region
    $region2: #{tpu_custom_call.1} parent=1 // pred_check
      _
    $region3: #{tpu_custom_call.1} parent=1 // pred_check_branch
      %11 = sbr.rel (0) target = $region5
    $region4: #{tpu_custom_call.1} parent=1 // pred_region
      %s13 = ssub.s32 256, 256
      %14 = vsyncadd [#allocation3], %s13
      %s16 = sshll.u32 [#allocation2], 4
      %s17 = int_to_ptr.vmem [resolvable:$true] %s16
      %19 = dma.hbm_to_vmem [thread:$0]  %s0, 256, %s17, [#allocation3]
    $region5: #{tpu_custom_call.1} parent=1 // pred_fallthru
      _
    // Predicated region
    $region6: #{tpu_custom_call.1} parent=1 // pred_check
      _
    $region7: #{tpu_custom_call.1} parent=1 // pred_check_branch
      %21 = sbr.rel (0) target = $region9
    $region8: #{tpu_custom_call.1} parent=1 // pred_region
      %s23 = ssub.s32 128, 128
      %24 = vsyncadd [#allocation6], %s23
      %s26 = sshll.u32 [#allocation5], 4
      %s27 = int_to_ptr.vmem [resolvable:$true] %s26
      %29 = dma.hbm_to_vmem [thread:$0]  %s1, 128, %s27, [#allocation6]
    $region9: #{tpu_custom_call.1} parent=1 // pred_fallthru
      _
    // Predicated region
    $region10: #{tpu_custom_call.1} parent=1 // pred_check
      _
    $region11: #{tpu_custom_call.1} parent=1 // pred_check_branch
      %31 = sbr.rel (0) target = $region13
    $region12: #{tpu_custom_call.1} parent=1 // pred_region
      %32 = dma.done [#allocation3], 256
    $region13: #{tpu_custom_call.1} parent=1 // pred_fallthru
      _
    // Predicated region
    $region14: #{tpu_custom_call.1} parent=1 // pred_check
      _
    $region15: #{tpu_custom_call.1} parent=1 // pred_check_branch
      %34 = sbr.rel (0) target = $region17
    $region16: #{tpu_custom_call.1} parent=1 // pred_region
      %35 = dma.done [#allocation6], 128
    $region17: #{tpu_custom_call.1} parent=1 // pred_fallthru
      _
    %v36 = vld [vmem:[#allocation5] sm:$0xff]
    %v37 = vld [vmem:[#allocation2] sm:$0xff]
    %v38 = vadd.f32 %v37, %v36
    %39 = vst [vmem:[#allocation7] sm:$0xff] %v38
    %v40 = vld [vmem:[#allocation2 + $0x8] sm:$0xff]
    %v41 = vadd.f32 %v40, %v36
    %42 = vst [vmem:[#allocation7 + $0x8] sm:$0xff] %v41
    // Predicated region
    $region18: #{tpu_custom_call.1} parent=1 // pred_check
      _
    $region19: #{tpu_custom_call.1} parent=1 // pred_check_branch
      %44 = sbr.rel (0) target = $region21
    $region20: #{tpu_custom_call.1} parent=1 // pred_region
      %s46 = ssub.s32 256, 256
      %47 = vsyncadd [#allocation4], %s46
      %s49 = sshll.u32 [#allocation7], 4
      %s50 = int_to_ptr.vmem [resolvable:$true] %s49
      %52 = dma.vmem_to_hbm [thread:$0]  %s50, 256, %s2, [#allocation4]
    $region21: #{tpu_custom_call.1} parent=1 // pred_fallthru
      _
    // Predicated region
    $region22: #{tpu_custom_call.1} parent=1 // pred_check
      _
    $region23: #{tpu_custom_call.1} parent=1 // pred_check_branch
      %54 = sbr.rel (0) target = $region25
    $region24: #{tpu_custom_call.1} parent=1 // pred_region
      %55 = dma.done [#allocation4], 256
    $region25: #{tpu_custom_call.1} parent=1 // pred_fallthru
      _
    %56 = vsyncpa [#allocation3], 1
    %57 = vsyncpa [#allocation6], 1
    %58 = vsyncpa [#allocation4], 1

</llo_original>
